<compile_context>
chip_gen: v6e
topology: v6e:2x2x1
jax: 0.10.0
libtpu: 0.0.40
codegen_flags: <defaults>
</compile_context>

<pallas_src>
import functools

import jax
import jax.numpy as jnp
from jax.experimental import pallas as pl
from jax.experimental.pallas import tpu as pltpu

LANES = 128
SUBLANES = 8
ROW_ALIGN = 16            # legal sublane tiling for both f32 (8,128) and bf16 (16,128)
MAX_BLOCK_ROWS = 2048     # (2048,128) f32 block = 1 MiB
NUM_LOSSES = 5            # rgb, entropy, opacity, opacity_dynamic, sigma_entropy


def _round_up(x, m):
    return ((x + m - 1) // m) * m


def _cdiv(a, b):
    return -(-a // b)


class _TileMeta:
    """Static (trace-time) tiling metadata for one flattened input."""

    def __init__(self, n, block_rows, nblocks):
        self.n = n                    # true element count
        self.block_rows = block_rows  # rows per block (multiple of 16)
        self.nblocks = nblocks        # number of row-blocks


def _keep_dtype(x):
    x = jnp.asarray(x)
    if x.dtype not in (jnp.float32, jnp.bfloat16):
        x = x.astype(jnp.float32)
    return x.reshape(-1)


def _to_tiles(x):
    """Flatten (keeping f32/bf16 dtype) into a lane-dense (rows, 128) slab."""
    x = _keep_dtype(x)
    n = int(x.shape[0])
    rows_needed = max(_cdiv(max(n, 1), LANES), 1)
    rows_a = _round_up(rows_needed, ROW_ALIGN)
    if rows_a <= MAX_BLOCK_ROWS:
        block_rows, nblocks = rows_a, 1
    else:
        nblocks = _cdiv(rows_a, MAX_BLOCK_ROWS)
        block_rows = _round_up(_cdiv(rows_a, nblocks), ROW_ALIGN)
    rows = block_rows * nblocks
    total = rows * LANES
    if n == total:
        x2d = x.reshape(rows, LANES)                 # copy-free path
    else:
        x2d = jnp.pad(x, (0, total - n)).reshape(rows, LANES)
    return x2d, _TileMeta(n, block_rows, nblocks)


def _tiles_like(x, meta):
    """Tile `x` with the exact same layout as an existing meta (rgb target)."""
    x = _keep_dtype(x)
    assert int(x.shape[0]) == meta.n, "rgb prediction/target size mismatch"
    rows = meta.block_rows * meta.nblocks
    total = rows * LANES
    if meta.n == total:
        return x.reshape(rows, LANES)
    return jnp.pad(x, (0, total - meta.n)).reshape(rows, LANES)


def _in_spec(meta, per_core):
    nb = meta.nblocks
    if nb == 1:
        index_map = lambda c, g: (0, 0)
    else:
        # Steps beyond this input's extent re-visit the last block (no OOB
        # DMA, no re-fetch since the index is unchanged); compute is skipped.
        def index_map(c, g, _nb=nb, _pc=per_core):
            return (jnp.minimum(c * _pc + g, _nb - 1), 0)
    return pl.BlockSpec((meta.block_rows, LANES), index_map)


# ------------------------------ fused kernel -------------------------------

def _fused_loss_kernel(metas, scales_over_n, per_core, grid_steps,
                       p_ref, t_ref, sw_ref, op_ref, od_ref, se_ref, o_ref):
    c = pl.program_id(0)          # core (parallel) axis
    g = pl.program_id(1)          # block (reduction) axis within this core
    blk = c * per_core + g        # global block index

    @pl.when(g == 0)
    def _init():
        o_ref[...] = jnp.zeros_like(o_ref)

    def fold(v, br):
        # (block_rows, 128) -> (8, 128) partial sum; pure VPU adds.
        return v.reshape(br // SUBLANES, SUBLANES, LANES).sum(axis=0)

    def accumulate(k, meta, needs_mask, elem_fn, *refs):
        br, nb = meta.block_rows, meta.nblocks
        tail = meta.n - (nb - 1) * br * LANES          # valid elems in last block
        mask_last = needs_mask and tail < br * LANES   # pad value would bias sum

        def add(mask_this):
            def _do():
                v = elem_fn(*(r[...].astype(jnp.float32) for r in refs))
                if mask_this:
                    # Local (per-block) index => no int32 overflow risk.
                    rows = jax.lax.broadcasted_iota(jnp.int32, (br, LANES), 0)
                    lanes = jax.lax.broadcasted_iota(jnp.int32, (br, LANES), 1)
                    v = jnp.where(rows * LANES + lanes < tail, v, 0.0)
                o_ref[0, k] += fold(v, br)
            return _do

        if mask_last:
            if nb == 1 and grid_steps == 1:
                add(True)()
            else:
                if nb > 1:
                    pl.when(blk < nb - 1)(add(False))   # steady state: no mask
                pl.when(blk == nb - 1)(add(True))       # last block: masked
        else:
            if nb == grid_steps:
                add(False)()
            else:
                pl.when(blk < nb)(add(False))           # skip exhausted input

    def _sq_diff(p, t):
        d = p - t
        return d * d

    def _clamped_entropy(x):      # torch: y = clamp(x, 1e-7, 1); -y*log(y)
        y = jnp.clip(x, 1e-7, 1.0)
        return -y * jnp.log(y)

    def _eps_entropy(x):          # torch: o = x + 1e-10; -o*log(o)
        o = x + 1e-10
        return -o * jnp.log(o)

    accumulate(0, metas['rgb'], False, _sq_diff, p_ref, t_ref)   # 0-pad -> 0
    accumulate(1, metas['sw'], True, _clamped_entropy, sw_ref)
    accumulate(2, metas['op'], True, _eps_entropy, op_ref)
    accumulate(3, metas['od'], True, _eps_entropy, od_ref)
    accumulate(4, metas['se'], False, lambda x: x, se_ref)       # 0-pad -> 0

    @pl.when(g == per_core - 1)
    def _finalize():
        # Fold the mean (1/n, static) and lambda scaling into the last step.
        for k in range(NUM_LOSSES):
            o_ref[0, k] = o_ref[0, k] * scales_over_n[k]


@functools.partial(jax.jit, static_argnames=("scales",))
def _fused_nerf_losses(rgb_pred, rgb_tgt, static_weight, opacity,
                       opacity_dynamic, sigma_entropy, *, scales):
    p2d, m_rgb = _to_tiles(rgb_pred)
    t2d = _tiles_like(rgb_tgt, m_rgb)
    sw2d, m_sw = _to_tiles(static_weight)
    op2d, m_op = _to_tiles(opacity)
    od2d, m_od = _to_tiles(opacity_dynamic)
    se2d, m_se = _to_tiles(sigma_entropy)

    metas = {'rgb': m_rgb, 'sw': m_sw, 'op': m_op, 'od': m_od, 'se': m_se}
    grid_blocks = max(m.nblocks for m in metas.values())
    num_cores = 2 if grid_blocks >= 2 else 1          # v7x: split across 2 TCs
    per_core = _cdiv(grid_blocks, num_cores)
    grid_steps = num_cores * per_core

    ns = (m_rgb.n, m_sw.n, m_op.n, m_od.n, m_se.n)
    scales_over_n = tuple(float(s) / max(n, 1) for s, n in zip(scales, ns))

    n_trans = m_sw.n + m_op.n + m_od.n
    cost = pl.CostEstimate(
        flops=3 * m_rgb.n + 4 * n_trans + m_se.n,
        transcendentals=n_trans,
        bytes_accessed=sum(a.size * a.dtype.itemsize
                           for a in (p2d, t2d, sw2d, op2d, od2d, se2d)),
    )

    kernel = functools.partial(_fused_loss_kernel, metas, scales_over_n,
                               per_core, grid_steps)
    parts = pl.pallas_call(
        kernel,
        out_shape=jax.ShapeDtypeStruct(
            (num_cores, NUM_LOSSES, SUBLANES, LANES), jnp.float32),
        grid=(num_cores, per_core),
        in_specs=[_in_spec(m_rgb, per_core), _in_spec(m_rgb, per_core),
                  _in_spec(m_sw, per_core), _in_spec(m_op, per_core),
                  _in_spec(m_od, per_core), _in_spec(m_se, per_core)],
        out_specs=pl.BlockSpec((1, NUM_LOSSES, SUBLANES, LANES),
                               lambda c, g: (c, 0, 0, 0)),
        compiler_params=pltpu.CompilerParams(
            dimension_semantics=("parallel", "arbitrary"),
            vmem_limit_bytes=28 * 1024 * 1024),
        cost_estimate=cost,
    )(p2d, t2d, sw2d, op2d, od2d, se2d)

    # Tiny (<=2,5,8,128) reduce of the already-scaled per-core partials; fused
    # into the same jitted executable.
    out = jnp.sum(parts, axis=(0, 2, 3))
    return {'rgb': out[0], 'entropy': out[1], 'opacity': out[2],
            'opacity_dynamic': out[3], 'sigma_entropy': out[4]}


# ------------------------------- NeRFLoss ----------------------------------

class NeRFLoss:
    def __init__(self, lambda_opacity=0.001, lambda_distortion=0.001,
                 lambda_entropy=0.001, sigma_entropy=1e-07,
                 lambda_opac_dyna=1e-07):
        self.lambda_opacity = lambda_opacity
        self.lambda_distortion = lambda_distortion
        self.lambda_entropy = lambda_entropy
        self.lambda_sigma_entropy = sigma_entropy
        self.lambda_opac_dyna = lambda_opac_dyna

    def __call__(self, results, target, use_dst_loss=False, **kwargs):
        batch_size = results['rgb'].shape[0]
        start_ = target.get('start', 0)
        end_ = target.get('end', batch_size)

        rgb_tgt = target['rgb']
        if start_ != 0 or end_ != rgb_tgt.shape[0]:
            rgb_tgt = rgb_tgt[start_:end_]

        scales = (1.0,
                  float(self.lambda_entropy),
                  float(self.lambda_opacity),
                  float(self.lambda_opac_dyna) / 1000.0,
                  float(self.lambda_sigma_entropy))

        d = dict(_fused_nerf_losses(
            results['rgb'], rgb_tgt, results['static_weight'],
            results['opacity'], results['opacity_dynamic'],
            results['sigma_entropy'], scales=scales))

        if self.lambda_distortion > 0 and use_dst_loss:
            # TODO(synk): DistortionLoss requires the vren per-ray inclusive
            # scan (distortion_loss_fw/bw); not implemented in this port.
            pass
        return d


# ------------------------------ reference ----------------------------------

def _reference(results, target, loss_mod):
    start_ = target.get('start', 0)
    end_ = target.get('end', results['rgb'].shape[0])
    d = {}
    d['rgb'] = jnp.mean((results['rgb'] - target['rgb'][start_:end_]) ** 2)
    y = jnp.clip(results['static_weight'], 1e-7, 1.0)
    d['entropy'] = jnp.mean(-y * jnp.log(y)) * loss_mod.lambda_entropy
    o = results['opacity'] + 1e-10
    d['opacity'] = jnp.mean(-o * jnp.log(o)) * loss_mod.lambda_opacity
    od = results['opacity_dynamic'] + 1e-10
    d['opacity_dynamic'] = (jnp.mean(-od * jnp.log(od))
                            * loss_mod.lambda_opac_dyna / 1000)
    d['sigma_entropy'] = (jnp.mean(results['sigma_entropy'])
                          * loss_mod.lambda_sigma_entropy)
    return d


# --------------------------------- main -------------------------------------

if __name__ == "__main__":
    key = jax.random.PRNGKey(0)
    k = jax.random.split(key, 6)

    n_rays = 128          # rays in this batch
    n_samples = 512       # total sample points along rays

    results = {
        'rgb': jax.random.uniform(k[0], (n_rays, 3), jnp.float32),
        'static_weight': jax.random.uniform(k[1], (n_rays,), jnp.float32,
                                            minval=0.01, maxval=0.99),
        'opacity': jax.random.uniform(k[2], (n_rays,), jnp.float32,
                                      minval=0.01, maxval=0.99),
        'opacity_dynamic': jax.random.uniform(k[3], (n_rays,), jnp.float32,
                                              minval=0.01, maxval=0.99),
        'sigma_entropy': jax.random.uniform(k[4], (n_samples,), jnp.float32),
    }
    target = {
        'rgb': jax.random.uniform(k[5], (n_rays, 3), jnp.float32),
    }

    loss = NeRFLoss()
    d = loss(results, target)
    d = {name: jax.block_until_ready(v) for name, v in d.items()}

    ref = _reference(results, target, loss)
    for name in ref:
        assert jnp.allclose(d[name], ref[name], rtol=1e-4, atol=1e-12), (
            name, float(d[name]), float(ref[name]))

    print("KERNEL_OK")
</pallas_src>

<mosaic_0001>
module attributes {stable_mosaic.version = 11 : i64} {
  func.func @_fused_loss_kernel(%arg0: i32, %arg1: i32, %arg2: memref<16x128xf32, #tpu.memory_space<vmem>>, %arg3: memref<16x128xf32, #tpu.memory_space<vmem>>, %arg4: memref<16x128xf32, #tpu.memory_space<vmem>>, %arg5: memref<16x128xf32, #tpu.memory_space<vmem>>, %arg6: memref<16x128xf32, #tpu.memory_space<vmem>>, %arg7: memref<16x128xf32, #tpu.memory_space<vmem>>, %arg8: memref<1x5x8x128xf32, #tpu.memory_space<vmem>>) attributes {dimension_semantics = [#tpu.dimension_semantics<parallel>, #tpu.dimension_semantics<arbitrary>], iteration_bounds = array<i64: 1, 1>, scalar_prefetch = 0 : i64, scratch_operands = 0 : i64, tpu.core_type = #tpu.core_type<tc>, window_params = [{pipeline_mode = #tpu.pipeline_mode<synchronous>, transform_indices = @transform_0, window_bounds = array<i64: 16, 128>}, {pipeline_mode = #tpu.pipeline_mode<synchronous>, transform_indices = @transform_1, window_bounds = array<i64: 16, 128>}, {pipeline_mode = #tpu.pipeline_mode<synchronous>, transform_indices = @transform_2, window_bounds = array<i64: 16, 128>}, {pipeline_mode = #tpu.pipeline_mode<synchronous>, transform_indices = @transform_3, window_bounds = array<i64: 16, 128>}, {pipeline_mode = #tpu.pipeline_mode<synchronous>, transform_indices = @transform_4, window_bounds = array<i64: 16, 128>}, {pipeline_mode = #tpu.pipeline_mode<synchronous>, transform_indices = @transform_5, window_bounds = array<i64: 16, 128>}, {transform_indices = @transform_6, window_bounds = array<i64: 1, 5, 8, 128>}]} {
    %c0_i32 = arith.constant 0 : i32
    %0 = arith.cmpi eq, %arg1, %c0_i32 : i32
    %1 = arith.extui %0 : i1 to i32
    %c0_i32_0 = arith.constant 0 : i32
    %2 = arith.cmpi ne, %1, %c0_i32_0 : i32
    scf.if %2 {
      %cst_69 = arith.constant 0.000000e+00 : f32
      %101 = vector.broadcast %cst_69 : f32 to vector<1x5x8x128xf32>
      %c0_70 = arith.constant 0 : index
      %c0_71 = arith.constant 0 : index
      %c0_72 = arith.constant 0 : index
      %c0_73 = arith.constant 0 : index
      %102 = vector.load %arg8[%c0_70, %c0_71, %c0_72, %c0_73] : memref<1x5x8x128xf32, #tpu.memory_space<vmem>>, vector<1x5x8x128xf32>
      tpu.vector_store %arg8[%c0_70, %c0_71, %c0_72, %c0_73], %101 {strides = array<i32>} : memref<1x5x8x128xf32, #tpu.memory_space<vmem>>, vector<1x5x8x128xf32>,
    } else {
    }
    %c0 = arith.constant 0 : index
    %c0_1 = arith.constant 0 : index
    %3 = vector.load %arg2[%c0, %c0_1] : memref<16x128xf32, #tpu.memory_space<vmem>>, vector<16x128xf32>
    %c0_2 = arith.constant 0 : index
    %c0_3 = arith.constant 0 : index
    %4 = vector.load %arg3[%c0_2, %c0_3] : memref<16x128xf32, #tpu.memory_space<vmem>>, vector<16x128xf32>
    %5 = arith.subf %3, %4 : vector<16x128xf32>
    %6 = arith.mulf %5, %5 : vector<16x128xf32>
    %c0_4 = arith.constant 0 : index
    %c0_5 = arith.constant 0 : index
    %c0_6 = arith.constant 0 : index
    %c0_7 = arith.constant 0 : index
    %7 = vector.load %arg8[%c0_4, %c0_5, %c0_6, %c0_7] : memref<1x5x8x128xf32, #tpu.memory_space<vmem>>, vector<1x1x8x128xf32>
    %8 = vector.shape_cast %7 : vector<1x1x8x128xf32> to vector<8x128xf32>
    %9 = vector.shape_cast %6 : vector<16x128xf32> to vector<2x8x128xf32>
    %cst = arith.constant dense<0.000000e+00> : vector<8x128xf32>
    %10 = vector.multi_reduction <add>, %9, %cst [0] : vector<2x8x128xf32> to vector<8x128xf32>
    %11 = arith.addf %8, %10 : vector<8x128xf32>
    %c0_8 = arith.constant 0 : index
    %c0_9 = arith.constant 0 : index
    %c0_10 = arith.constant 0 : index
    %c0_11 = arith.constant 0 : index
    %12 = vector.load %arg8[%c0_8, %c0_9, %c0_10, %c0_11] : memref<1x5x8x128xf32, #tpu.memory_space<vmem>>, vector<1x1x8x128xf32>
    %13 = vector.shape_cast %12 : vector<1x1x8x128xf32> to vector<8x128xf32>
    %14 = vector.shape_cast %11 : vector<8x128xf32> to vector<1x1x8x128xf32>
    tpu.vector_store %arg8[%c0_8, %c0_9, %c0_10, %c0_11], %14 {strides = array<i32>} : memref<1x5x8x128xf32, #tpu.memory_space<vmem>>, vector<1x1x8x128xf32>,
    %c0_12 = arith.constant 0 : index
    %c0_13 = arith.constant 0 : index
    %15 = vector.load %arg4[%c0_12, %c0_13] : memref<16x128xf32, #tpu.memory_space<vmem>>, vector<16x128xf32>
    %cst_14 = arith.constant 1.000000e-07 : f32
    %cst_15 = arith.constant 1.000000e+00 : f32
    %16 = vector.broadcast %cst_14 : f32 to vector<16x128xf32>
    %17 = arith.maximumf %16, %15 : vector<16x128xf32>
    %18 = vector.broadcast %cst_15 : f32 to vector<16x128xf32>
    %19 = arith.minimumf %18, %17 : vector<16x128xf32>
    %cst_16 = arith.constant 0.000000e+00 : f32
    %20 = vector.broadcast %cst_16 : f32 to vector<16x128xf32>
    %21 = arith.subf %20, %19 : vector<16x128xf32>
    %22 = math.log %19 : vector<16x128xf32>
    %23 = arith.mulf %21, %22 : vector<16x128xf32>
    %24 = tpu.iota {dimensions = array<i32: 0>} : vector<16x128xi32>
    %25 = tpu.iota {dimensions = array<i32: 1>} : vector<16x128xi32>
    %c128_i32 = arith.constant 128 : i32
    %26 = vector.broadcast %c128_i32 : i32 to vector<16x128xi32>
    %27 = arith.muli %24, %26 : vector<16x128xi32>
    %28 = arith.addi %27, %25 : vector<16x128xi32>
    %c128_i32_17 = arith.constant 128 : i32
    %29 = vector.broadcast %c128_i32_17 : i32 to vector<16x128xi32>
    %30 = arith.cmpi slt, %28, %29 : vector<16x128xi32>
    %cst_18 = arith.constant 0.000000e+00 : f32
    %31 = vector.broadcast %cst_18 : f32 to vector<16x128xf32>
    %32 = arith.select %30, %23, %31 : vector<16x128xi1>, vector<16x128xf32>
    %c0_19 = arith.constant 0 : index
    %c1 = arith.constant 1 : index
    %c0_20 = arith.constant 0 : index
    %c0_21 = arith.constant 0 : index
    %33 = vector.load %arg8[%c0_19, %c1, %c0_20, %c0_21] : memref<1x5x8x128xf32, #tpu.memory_space<vmem>>, vector<1x1x8x128xf32>
    %34 = vector.shape_cast %33 : vector<1x1x8x128xf32> to vector<8x128xf32>
    %35 = vector.shape_cast %32 : vector<16x128xf32> to vector<2x8x128xf32>
    %cst_22 = arith.constant dense<0.000000e+00> : vector<8x128xf32>
    %36 = vector.multi_reduction <add>, %35, %cst_22 [0] : vector<2x8x128xf32> to vector<8x128xf32>
    %37 = arith.addf %34, %36 : vector<8x128xf32>
    %c0_23 = arith.constant 0 : index
    %c1_24 = arith.constant 1 : index
    %c0_25 = arith.constant 0 : index
    %c0_26 = arith.constant 0 : index
    %38 = vector.load %arg8[%c0_23, %c1_24, %c0_25, %c0_26] : memref<1x5x8x128xf32, #tpu.memory_space<vmem>>, vector<1x1x8x128xf32>
    %39 = vector.shape_cast %38 : vector<1x1x8x128xf32> to vector<8x128xf32>
    %40 = vector.shape_cast %37 : vector<8x128xf32> to vector<1x1x8x128xf32>
    tpu.vector_store %arg8[%c0_23, %c1_24, %c0_25, %c0_26], %40 {strides = array<i32>} : memref<1x5x8x128xf32, #tpu.memory_space<vmem>>, vector<1x1x8x128xf32>,
    %c0_27 = arith.constant 0 : index
    %c0_28 = arith.constant 0 : index
    %41 = vector.load %arg5[%c0_27, %c0_28] : memref<16x128xf32, #tpu.memory_space<vmem>>, vector<16x128xf32>
    %cst_29 = arith.constant 1.000000e-10 : f32
    %42 = vector.broadcast %cst_29 : f32 to vector<16x128xf32>
    %43 = arith.addf %41, %42 : vector<16x128xf32>
    %cst_30 = arith.constant 0.000000e+00 : f32
    %44 = vector.broadcast %cst_30 : f32 to vector<16x128xf32>
    %45 = arith.subf %44, %43 : vector<16x128xf32>
    %46 = math.log %43 : vector<16x128xf32>
    %47 = arith.mulf %45, %46 : vector<16x128xf32>
    %48 = tpu.iota {dimensions = array<i32: 0>} : vector<16x128xi32>
    %49 = tpu.iota {dimensions = array<i32: 1>} : vector<16x128xi32>
    %c128_i32_31 = arith.constant 128 : i32
    %50 = vector.broadcast %c128_i32_31 : i32 to vector<16x128xi32>
    %51 = arith.muli %48, %50 : vector<16x128xi32>
    %52 = arith.addi %51, %49 : vector<16x128xi32>
    %c128_i32_32 = arith.constant 128 : i32
    %53 = vector.broadcast %c128_i32_32 : i32 to vector<16x128xi32>
    %54 = arith.cmpi slt, %52, %53 : vector<16x128xi32>
    %cst_33 = arith.constant 0.000000e+00 : f32
    %55 = vector.broadcast %cst_33 : f32 to vector<16x128xf32>
    %56 = arith.select %54, %47, %55 : vector<16x128xi1>, vector<16x128xf32>
    %c0_34 = arith.constant 0 : index
    %c2 = arith.constant 2 : index
    %c0_35 = arith.constant 0 : index
    %c0_36 = arith.constant 0 : index
    %57 = vector.load %arg8[%c0_34, %c2, %c0_35, %c0_36] : memref<1x5x8x128xf32, #tpu.memory_space<vmem>>, vector<1x1x8x128xf32>
    %58 = vector.shape_cast %57 : vector<1x1x8x128xf32> to vector<8x128xf32>
    %59 = vector.shape_cast %56 : vector<16x128xf32> to vector<2x8x128xf32>
    %cst_37 = arith.constant dense<0.000000e+00> : vector<8x128xf32>
    %60 = vector.multi_reduction <add>, %59, %cst_37 [0] : vector<2x8x128xf32> to vector<8x128xf32>
    %61 = arith.addf %58, %60 : vector<8x128xf32>
    %c0_38 = arith.constant 0 : index
    %c2_39 = arith.constant 2 : index
    %c0_40 = arith.constant 0 : index
    %c0_41 = arith.constant 0 : index
    %62 = vector.load %arg8[%c0_38, %c2_39, %c0_40, %c0_41] : memref<1x5x8x128xf32, #tpu.memory_space<vmem>>, vector<1x1x8x128xf32>
    %63 = vector.shape_cast %62 : vector<1x1x8x128xf32> to vector<8x128xf32>
    %64 = vector.shape_cast %61 : vector<8x128xf32> to vector<1x1x8x128xf32>
    tpu.vector_store %arg8[%c0_38, %c2_39, %c0_40, %c0_41], %64 {strides = array<i32>} : memref<1x5x8x128xf32, #tpu.memory_space<vmem>>, vector<1x1x8x128xf32>,
    %c0_42 = arith.constant 0 : index
    %c0_43 = arith.constant 0 : index
    %65 = vector.load %arg6[%c0_42, %c0_43] : memref<16x128xf32, #tpu.memory_space<vmem>>, vector<16x128xf32>
    %cst_44 = arith.constant 1.000000e-10 : f32
    %66 = vector.broadcast %cst_44 : f32 to vector<16x128xf32>
    %67 = arith.addf %65, %66 : vector<16x128xf32>
    %cst_45 = arith.constant 0.000000e+00 : f32
    %68 = vector.broadcast %cst_45 : f32 to vector<16x128xf32>
    %69 = arith.subf %68, %67 : vector<16x128xf32>
    %70 = math.log %67 : vector<16x128xf32>
    %71 = arith.mulf %69, %70 : vector<16x128xf32>
    %72 = tpu.iota {dimensions = array<i32: 0>} : vector<16x128xi32>
    %73 = tpu.iota {dimensions = array<i32: 1>} : vector<16x128xi32>
    %c128_i32_46 = arith.constant 128 : i32
    %74 = vector.broadcast %c128_i32_46 : i32 to vector<16x128xi32>
    %75 = arith.muli %72, %74 : vector<16x128xi32>
    %76 = arith.addi %75, %73 : vector<16x128xi32>
    %c128_i32_47 = arith.constant 128 : i32
    %77 = vector.broadcast %c128_i32_47 : i32 to vector<16x128xi32>
    %78 = arith.cmpi slt, %76, %77 : vector<16x128xi32>
    %cst_48 = arith.constant 0.000000e+00 : f32
    %79 = vector.broadcast %cst_48 : f32 to vector<16x128xf32>
    %80 = arith.select %78, %71, %79 : vector<16x128xi1>, vector<16x128xf32>
    %c0_49 = arith.constant 0 : index
    %c3 = arith.constant 3 : index
    %c0_50 = arith.constant 0 : index
    %c0_51 = arith.constant 0 : index
    %81 = vector.load %arg8[%c0_49, %c3, %c0_50, %c0_51] : memref<1x5x8x128xf32, #tpu.memory_space<vmem>>, vector<1x1x8x128xf32>
    %82 = vector.shape_cast %81 : vector<1x1x8x128xf32> to vector<8x128xf32>
    %83 = vector.shape_cast %80 : vector<16x128xf32> to vector<2x8x128xf32>
    %cst_52 = arith.constant dense<0.000000e+00> : vector<8x128xf32>
    %84 = vector.multi_reduction <add>, %83, %cst_52 [0] : vector<2x8x128xf32> to vector<8x128xf32>
    %85 = arith.addf %82, %84 : vector<8x128xf32>
    %c0_53 = arith.constant 0 : index
    %c3_54 = arith.constant 3 : index
    %c0_55 = arith.constant 0 : index
    %c0_56 = arith.constant 0 : index
    %86 = vector.load %arg8[%c0_53, %c3_54, %c0_55, %c0_56] : memref<1x5x8x128xf32, #tpu.memory_space<vmem>>, vector<1x1x8x128xf32>
    %87 = vector.shape_cast %86 : vector<1x1x8x128xf32> to vector<8x128xf32>
    %88 = vector.shape_cast %85 : vector<8x128xf32> to vector<1x1x8x128xf32>
    tpu.vector_store %arg8[%c0_53, %c3_54, %c0_55, %c0_56], %88 {strides = array<i32>} : memref<1x5x8x128xf32, #tpu.memory_space<vmem>>, vector<1x1x8x128xf32>,
    %c0_57 = arith.constant 0 : index
    %c0_58 = arith.constant 0 : index
    %89 = vector.load %arg7[%c0_57, %c0_58] : memref<16x128xf32, #tpu.memory_space<vmem>>, vector<16x128xf32>
    %c0_59 = arith.constant 0 : index
    %c4 = arith.constant 4 : index
    %c0_60 = arith.constant 0 : index
    %c0_61 = arith.constant 0 : index
    %90 = vector.load %arg8[%c0_59, %c4, %c0_60, %c0_61] : memref<1x5x8x128xf32, #tpu.memory_space<vmem>>, vector<1x1x8x128xf32>
    %91 = vector.shape_cast %90 : vector<1x1x8x128xf32> to vector<8x128xf32>
    %92 = vector.shape_cast %89 : vector<16x128xf32> to vector<2x8x128xf32>
    %cst_62 = arith.constant dense<0.000000e+00> : vector<8x128xf32>
    %93 = vector.multi_reduction <add>, %92, %cst_62 [0] : vector<2x8x128xf32> to vector<8x128xf32>
    %94 = arith.addf %91, %93 : vector<8x128xf32>
    %c0_63 = arith.constant 0 : index
    %c4_64 = arith.constant 4 : index
    %c0_65 = arith.constant 0 : index
    %c0_66 = arith.constant 0 : index
    %95 = vector.load %arg8[%c0_63, %c4_64, %c0_65, %c0_66] : memref<1x5x8x128xf32, #tpu.memory_space<vmem>>, vector<1x1x8x128xf32>
    %96 = vector.shape_cast %95 : vector<1x1x8x128xf32> to vector<8x128xf32>
    %97 = vector.shape_cast %94 : vector<8x128xf32> to vector<1x1x8x128xf32>
    tpu.vector_store %arg8[%c0_63, %c4_64, %c0_65, %c0_66], %97 {strides = array<i32>} : memref<1x5x8x128xf32, #tpu.memory_space<vmem>>, vector<1x1x8x128xf32>,
    %c0_i32_67 = arith.constant 0 : i32
    %98 = arith.cmpi eq, %arg1, %c0_i32_67 : i32
    %99 = arith.extui %98 : i1 to i32
    %c0_i32_68 = arith.constant 0 : i32
    %100 = arith.cmpi ne, %99, %c0_i32_68 : i32
    scf.if %100 {
      %c0_69 = arith.constant 0 : index
      %c0_70 = arith.constant 0 : index
      %c0_71 = arith.constant 0 : index
      %c0_72 = arith.constant 0 : index
      %101 = vector.load %arg8[%c0_69, %c0_70, %c0_71, %c0_72] : memref<1x5x8x128xf32, #tpu.memory_space<vmem>>, vector<1x1x8x128xf32>
      %102 = vector.shape_cast %101 : vector<1x1x8x128xf32> to vector<8x128xf32>
      %cst_73 = arith.constant 0.00260416674 : f32
      %103 = vector.broadcast %cst_73 : f32 to vector<8x128xf32>
      %104 = arith.mulf %102, %103 : vector<8x128xf32>
      %c0_74 = arith.constant 0 : index
      %c0_75 = arith.constant 0 : index
      %c0_76 = arith.constant 0 : index
      %c0_77 = arith.constant 0 : index
      %105 = vector.load %arg8[%c0_74, %c0_75, %c0_76, %c0_77] : memref<1x5x8x128xf32, #tpu.memory_space<vmem>>, vector<1x1x8x128xf32>
      %106 = vector.shape_cast %105 : vector<1x1x8x128xf32> to vector<8x128xf32>
      %107 = vector.shape_cast %104 : vector<8x128xf32> to vector<1x1x8x128xf32>
      tpu.vector_store %arg8[%c0_74, %c0_75, %c0_76, %c0_77], %107 {strides = array<i32>} : memref<1x5x8x128xf32, #tpu.memory_space<vmem>>, vector<1x1x8x128xf32>,
      %c0_78 = arith.constant 0 : index
      %c1_79 = arith.constant 1 : index
      %c0_80 = arith.constant 0 : index
      %c0_81 = arith.constant 0 : index
      %108 = vector.load %arg8[%c0_78, %c1_79, %c0_80, %c0_81] : memref<1x5x8x128xf32, #tpu.memory_space<vmem>>, vector<1x1x8x128xf32>
      %109 = vector.shape_cast %108 : vector<1x1x8x128xf32> to vector<8x128xf32>
      %cst_82 = arith.constant 7.812500e-06 : f32
      %110 = vector.broadcast %cst_82 : f32 to vector<8x128xf32>
      %111 = arith.mulf %109, %110 : vector<8x128xf32>
      %c0_83 = arith.constant 0 : index
      %c1_84 = arith.constant 1 : index
      %c0_85 = arith.constant 0 : index
      %c0_86 = arith.constant 0 : index
      %112 = vector.load %arg8[%c0_83, %c1_84, %c0_85, %c0_86] : memref<1x5x8x128xf32, #tpu.memory_space<vmem>>, vector<1x1x8x128xf32>
      %113 = vector.shape_cast %112 : vector<1x1x8x128xf32> to vector<8x128xf32>
      %114 = vector.shape_cast %111 : vector<8x128xf32> to vector<1x1x8x128xf32>
      tpu.vector_store %arg8[%c0_83, %c1_84, %c0_85, %c0_86], %114 {strides = array<i32>} : memref<1x5x8x128xf32, #tpu.memory_space<vmem>>, vector<1x1x8x128xf32>,
      %c0_87 = arith.constant 0 : index
      %c2_88 = arith.constant 2 : index
      %c0_89 = arith.constant 0 : index
      %c0_90 = arith.constant 0 : index
      %115 = vector.load %arg8[%c0_87, %c2_88, %c0_89, %c0_90] : memref<1x5x8x128xf32, #tpu.memory_space<vmem>>, vector<1x1x8x128xf32>
      %116 = vector.shape_cast %115 : vector<1x1x8x128xf32> to vector<8x128xf32>
      %cst_91 = arith.constant 7.812500e-06 : f32
      %117 = vector.broadcast %cst_91 : f32 to vector<8x128xf32>
      %118 = arith.mulf %116, %117 : vector<8x128xf32>
      %c0_92 = arith.constant 0 : index
      %c2_93 = arith.constant 2 : index
      %c0_94 = arith.constant 0 : index
      %c0_95 = arith.constant 0 : index
      %119 = vector.load %arg8[%c0_92, %c2_93, %c0_94, %c0_95] : memref<1x5x8x128xf32, #tpu.memory_space<vmem>>, vector<1x1x8x128xf32>
      %120 = vector.shape_cast %119 : vector<1x1x8x128xf32> to vector<8x128xf32>
      %121 = vector.shape_cast %118 : vector<8x128xf32> to vector<1x1x8x128xf32>
      tpu.vector_store %arg8[%c0_92, %c2_93, %c0_94, %c0_95], %121 {strides = array<i32>} : memref<1x5x8x128xf32, #tpu.memory_space<vmem>>, vector<1x1x8x128xf32>,
      %c0_96 = arith.constant 0 : index
      %c3_97 = arith.constant 3 : index
      %c0_98 = arith.constant 0 : index
      %c0_99 = arith.constant 0 : index
      %122 = vector.load %arg8[%c0_96, %c3_97, %c0_98, %c0_99] : memref<1x5x8x128xf32, #tpu.memory_space<vmem>>, vector<1x1x8x128xf32>
      %123 = vector.shape_cast %122 : vector<1x1x8x128xf32> to vector<8x128xf32>
      %cst_100 = arith.constant 7.812500e-13 : f32
      %124 = vector.broadcast %cst_100 : f32 to vector<8x128xf32>
      %125 = arith.mulf %123, %124 : vector<8x128xf32>
      %c0_101 = arith.constant 0 : index
      %c3_102 = arith.constant 3 : index
      %c0_103 = arith.constant 0 : index
      %c0_104 = arith.constant 0 : index
      %126 = vector.load %arg8[%c0_101, %c3_102, %c0_103, %c0_104] : memref<1x5x8x128xf32, #tpu.memory_space<vmem>>, vector<1x1x8x128xf32>
      %127 = vector.shape_cast %126 : vector<1x1x8x128xf32> to vector<8x128xf32>
      %128 = vector.shape_cast %125 : vector<8x128xf32> to vector<1x1x8x128xf32>
      tpu.vector_store %arg8[%c0_101, %c3_102, %c0_103, %c0_104], %128 {strides = array<i32>} : memref<1x5x8x128xf32, #tpu.memory_space<vmem>>, vector<1x1x8x128xf32>,
      %c0_105 = arith.constant 0 : index
      %c4_106 = arith.constant 4 : index
      %c0_107 = arith.constant 0 : index
      %c0_108 = arith.constant 0 : index
      %129 = vector.load %arg8[%c0_105, %c4_106, %c0_107, %c0_108] : memref<1x5x8x128xf32, #tpu.memory_space<vmem>>, vector<1x1x8x128xf32>
      %130 = vector.shape_cast %129 : vector<1x1x8x128xf32> to vector<8x128xf32>
      %cst_109 = arith.constant 1.95312502E-10 : f32
      %131 = vector.broadcast %cst_109 : f32 to vector<8x128xf32>
      %132 = arith.mulf %130, %131 : vector<8x128xf32>
      %c0_110 = arith.constant 0 : index
      %c4_111 = arith.constant 4 : index
      %c0_112 = arith.constant 0 : index
      %c0_113 = arith.constant 0 : index
      %133 = vector.load %arg8[%c0_110, %c4_111, %c0_112, %c0_113] : memref<1x5x8x128xf32, #tpu.memory_space<vmem>>, vector<1x1x8x128xf32>
      %134 = vector.shape_cast %133 : vector<1x1x8x128xf32> to vector<8x128xf32>
      %135 = vector.shape_cast %132 : vector<8x128xf32> to vector<1x1x8x128xf32>
      tpu.vector_store %arg8[%c0_110, %c4_111, %c0_112, %c0_113], %135 {strides = array<i32>} : memref<1x5x8x128xf32, #tpu.memory_space<vmem>>, vector<1x1x8x128xf32>,
    } else {
    }
    return
  }
  func.func @transform_0(%arg0: i32, %arg1: i32) -> (i32, i32) {
    %c0_i32 = arith.constant 0 : i32
    %c0_i32_0 = arith.constant 0 : i32
    %c0_i32_1 = arith.constant 0 : i32
    return %c0_i32, %c0_i32_0 : i32, i32
  }
  func.func @transform_1(%arg0: i32, %arg1: i32) -> (i32, i32) {
    %c0_i32 = arith.constant 0 : i32
    %c0_i32_0 = arith.constant 0 : i32
    %c0_i32_1 = arith.constant 0 : i32
    return %c0_i32, %c0_i32_0 : i32, i32
  }
  func.func @transform_2(%arg0: i32, %arg1: i32) -> (i32, i32) {
    %c0_i32 = arith.constant 0 : i32
    %c0_i32_0 = arith.constant 0 : i32
    %c0_i32_1 = arith.constant 0 : i32
    return %c0_i32, %c0_i32_0 : i32, i32
  }
  func.func @transform_3(%arg0: i32, %arg1: i32) -> (i32, i32) {
    %c0_i32 = arith.constant 0 : i32
    %c0_i32_0 = arith.constant 0 : i32
    %c0_i32_1 = arith.constant 0 : i32
    return %c0_i32, %c0_i32_0 : i32, i32
  }
  func.func @transform_4(%arg0: i32, %arg1: i32) -> (i32, i32) {
    %c0_i32 = arith.constant 0 : i32
    %c0_i32_0 = arith.constant 0 : i32
    %c0_i32_1 = arith.constant 0 : i32
    return %c0_i32, %c0_i32_0 : i32, i32
  }
  func.func @transform_5(%arg0: i32, %arg1: i32) -> (i32, i32) {
    %c0_i32 = arith.constant 0 : i32
    %c0_i32_0 = arith.constant 0 : i32
    %c0_i32_1 = arith.constant 0 : i32
    return %c0_i32, %c0_i32_0 : i32, i32
  }
  func.func @transform_6(%arg0: i32, %arg1: i32) -> (i32, i32, i32, i32) {
    %c0_i32 = arith.constant 0 : i32
    %c0_i32_0 = arith.constant 0 : i32
    %c0_i32_1 = arith.constant 0 : i32
    %c0_i32_2 = arith.constant 0 : i32
    return %arg0, %c0_i32, %c0_i32_0, %c0_i32_1 : i32, i32, i32, i32
  }
}

</mosaic_0001>

<llo_original>
// kernel: _fused_nerf_losses.1
$region0: #{_fused_nerf_losses.1}
  #allocation0 [shape = 'u32[]', space=smem, size = 0x4, offset = 0x4, fixed_abs, tag = 'smem constant byte address 0x4 - core index']
  #allocation1 [shape = 'u32[144,128]{1,0:T(1,128)}', space=vmem, size = 0x12000, scoped, tag = 'internal scratch']
  %s0 = inlined_call_operand.vmem [shape: f32[16,128], index: 0, kind: input, shape index: {}]
  %s1 = inlined_call_operand.vmem [shape: f32[16,128], index: 1, kind: input, shape index: {}]
  %s2 = inlined_call_operand.vmem [shape: f32[16,128], index: 2, kind: input, shape index: {}]
  %s3 = inlined_call_operand.vmem [shape: f32[16,128], index: 3, kind: input, shape index: {}]
  %s4 = inlined_call_operand.vmem [shape: f32[16,128], index: 4, kind: input, shape index: {}]
  %s5 = inlined_call_operand.vmem [shape: f32[16,128], index: 5, kind: input, shape index: {}]
  %s6 = inlined_call_operand.vmem [shape: f32[1,5,8,128], index: 6, kind: output, shape index: {}]
  %s7 = sld [smem:[#allocation0]]
  $region42: #{_fused_nerf_losses.1} parent=0
    _
  %s9 = ssub.s32 1, %s7
  %s10 = scalar_select 0, %s9, %s7
  // Predicated region
  $region2: #{_fused_nerf_losses.1} parent=0 // pred_check
    _
  $region3: #{_fused_nerf_losses.1} parent=0 // pred_check_branch
    %12 = sbr.rel (0) target = $region5
  $region4: #{_fused_nerf_losses.1} parent=0 // pred_region
    _
  $region5: #{_fused_nerf_losses.1} parent=0 // pred_fallthru
    _
  // Predicated region
  $region6: #{_fused_nerf_losses.1} parent=0 // pred_check
    _
  $region7: #{_fused_nerf_losses.1} parent=0 // pred_check_branch
    %14 = sbr.rel (0) target = $region9
  $region8: #{_fused_nerf_losses.1} parent=0 // pred_region
    _
  $region9: #{_fused_nerf_losses.1} parent=0 // pred_fallthru
    _
  // Predicated region
  $region10: #{_fused_nerf_losses.1} parent=0 // pred_check
    _
  $region11: #{_fused_nerf_losses.1} parent=0 // pred_check_branch
    %16 = sbr.rel (0) target = $region13
  $region12: #{_fused_nerf_losses.1} parent=0 // pred_region
    _
  $region13: #{_fused_nerf_losses.1} parent=0 // pred_fallthru
    _
  // Predicated region
  $region14: #{_fused_nerf_losses.1} parent=0 // pred_check
    _
  $region15: #{_fused_nerf_losses.1} parent=0 // pred_check_branch
    %18 = sbr.rel (0) target = $region17
  $region16: #{_fused_nerf_losses.1} parent=0 // pred_region
    _
  $region17: #{_fused_nerf_losses.1} parent=0 // pred_fallthru
    _
  // Predicated region
  $region18: #{_fused_nerf_losses.1} parent=0 // pred_check
    _
  $region19: #{_fused_nerf_losses.1} parent=0 // pred_check_branch
    %20 = sbr.rel (0) target = $region21
  $region20: #{_fused_nerf_losses.1} parent=0 // pred_region
    _
  $region21: #{_fused_nerf_losses.1} parent=0 // pred_fallthru
    _
  // Predicated region
  $region22: #{_fused_nerf_losses.1} parent=0 // pred_check
    _
  $region23: #{_fused_nerf_losses.1} parent=0 // pred_check_branch
    %22 = sbr.rel (0) target = $region25
  $region24: #{_fused_nerf_losses.1} parent=0 // pred_region
    _
  $region25: #{_fused_nerf_losses.1} parent=0 // pred_fallthru
    _
  %p23 = scmp.eq.s32.totalorder 0, 0
  // Predicated region
  $region26: #{_fused_nerf_losses.1} parent=0 // pred_check
    %p24 = pneg %p23
  $region27: #{_fused_nerf_losses.1} parent=0 // pred_check_branch
    %26 = sbr.rel (%p24) target = $region29
  $region28: #{_fused_nerf_losses.1} parent=0 // pred_region
    %27 = vst [vmem:[%s6] sm:$0xff] 0.0
    %28 = vst [vmem:[%s6 + $0x8] sm:$0xff] 0.0
    %29 = vst [vmem:[%s6 + $0x10] sm:$0xff] 0.0
    %30 = vst [vmem:[%s6 + $0x18] sm:$0xff] 0.0
    %31 = vst [vmem:[%s6 + $0x20] sm:$0xff] 0.0
  $region29: #{_fused_nerf_losses.1} parent=0 // pred_fallthru
    _
  %v32 = vld [vmem:[%s0] sm:$0xff]
  %v33 = vld [vmem:[%s0 + $0x8] sm:$0xff]
  %v34 = vld [vmem:[%s1] sm:$0xff]
  %v35 = vld [vmem:[%s1 + $0x8] sm:$0xff]
  %v36 = vsub.f32 %v32, %v34
  %v37 = vsub.f32 %v33, %v35
  %v38 = vmul.f32 %v36, %v36
  %v39 = vmul.f32 %v37, %v37
  %v40 = vld [vmem:[%s6] sm:$0xff]
  %v41 = vadd.f32 %v38, %v39
  %v42 = vadd.f32 %v40, %v41
  %43 = vst [vmem:[%s6] sm:$0xff] %v42
  %v44 = vld [vmem:[%s2] sm:$0xff]
  %v45 = vld [vmem:[%s2 + $0x8] sm:$0xff]
  %v46 = vmax.f32 %v44, 1e-07
  %v47 = vmax.f32 %v45, 1e-07
  %v48 = vmin.f32 %v46, 1.0
  %v49 = vmin.f32 %v47, 1.0
  %v50 = vsub.f32 0.0, %v48
  %v51 = vsub.f32 0.0, %v49
  %v52 = vlog2.pop %v48
  %v53 = vmul.f32 %v52, 0.6931472
  %v54 = vlog2.pop %v49
  %v55 = vmul.f32 %v54, 0.6931472
  %v56 = vmul.f32 %v50, %v53
  %v57 = vmul.f32 %v51, %v55
  %v58 = vlaneseq
  %v59 = vshrl.u32 %v58, 7
  %v60 = vadd.s32 %v59, 8
  %v61 = vlaneseq
  %v62 = vand.u32 %v61, 127
  %v63 = vmul.u32 %v59, 128
  %v64 = vmul.u32 %v60, 128
  %v65 = vadd.s32 %v63, %v62
  %v66 = vadd.s32 %v64, %v62
  %vm67 = vcmp.lt.s32.totalorder %v65, 128
  %vm68 = vcmp.lt.s32.totalorder %v66, 128
  %v69 = vsel %vm67, %v56, 0.0
  %v70 = vsel %vm68, %v57, 0.0
  %s71 = scalar_lea.vmem %s6, 8
  %v72 = vld [vmem:[%s71] sm:$0xff]
  %v73 = vadd.f32 %v69, %v70
  %v74 = vadd.f32 %v72, %v73
  %75 = vst [vmem:[%s71] sm:$0xff] %v74
  %v76 = vld [vmem:[%s3] sm:$0xff]
  %v77 = vld [vmem:[%s3 + $0x8] sm:$0xff]
  %v78 = vadd.f32 %v76, 1e-10
  %v79 = vadd.f32 %v77, 1e-10
  %v80 = vsub.f32 0.0, %v78
  %v81 = vsub.f32 0.0, %v79
  %v82 = vlog2.pop %v78
  %v83 = vmul.f32 %v82, 0.6931472
  %v84 = vlog2.pop %v79
  %v85 = vmul.f32 %v84, 0.6931472
  %v86 = vmul.f32 %v80, %v83
  %v87 = vmul.f32 %v81, %v85
  %v88 = vsel %vm67, %v86, 0.0
  %v89 = vsel %vm68, %v87, 0.0
  %s90 = scalar_lea.vmem %s6, 16
  %v91 = vld [vmem:[%s90] sm:$0xff]
  %v92 = vadd.f32 %v88, %v89
  %v93 = vadd.f32 %v91, %v92
  %94 = vst [vmem:[%s90] sm:$0xff] %v93
  %v95 = vld [vmem:[%s4] sm:$0xff]
  %v96 = vld [vmem:[%s4 + $0x8] sm:$0xff]
  %v97 = vadd.f32 %v95, 1e-10
  %v98 = vadd.f32 %v96, 1e-10
  %v99 = vsub.f32 0.0, %v97
  %v100 = vsub.f32 0.0, %v98
  %v101 = vlog2.pop %v97
  %v102 = vmul.f32 %v101, 0.6931472
  %v103 = vlog2.pop %v98
  %v104 = vmul.f32 %v103, 0.6931472
  %v105 = vmul.f32 %v99, %v102
  %v106 = vmul.f32 %v100, %v104
  %v107 = vsel %vm67, %v105, 0.0
  %v108 = vsel %vm68, %v106, 0.0
  %s109 = scalar_lea.vmem %s6, 24
  %v110 = vld [vmem:[%s109] sm:$0xff]
  %v111 = vadd.f32 %v107, %v108
  %v112 = vadd.f32 %v110, %v111
  %113 = vst [vmem:[%s109] sm:$0xff] %v112
  %v114 = vld [vmem:[%s5] sm:$0xff]
  %v115 = vld [vmem:[%s5 + $0x8] sm:$0xff]
  %s116 = scalar_lea.vmem %s6, 32
  %v117 = vld [vmem:[%s116] sm:$0xff]
  %v118 = vadd.f32 %v114, %v115
  %v119 = vadd.f32 %v117, %v118
  %120 = vst [vmem:[%s116] sm:$0xff] %v119
  // Predicated region
  $region30: #{_fused_nerf_losses.1} parent=0 // pred_check
    %p121 = pneg %p23
  $region31: #{_fused_nerf_losses.1} parent=0 // pred_check_branch
    %123 = sbr.rel (%p121) target = $region33
  $region32: #{_fused_nerf_losses.1} parent=0 // pred_region
    %v124 = vld [vmem:[%s6] sm:$0xff]
    %v125 = vmul.f32 %v124, 0.0026041667
    %126 = vst [vmem:[%s6] sm:$0xff] %v125
    %v127 = vld [vmem:[%s71] sm:$0xff]
    %v128 = vmul.f32 %v127, 7.8125e-06
    %129 = vst [vmem:[%s71] sm:$0xff] %v128
    %v130 = vld [vmem:[%s90] sm:$0xff]
    %v131 = vmul.f32 %v130, 7.8125e-06
    %132 = vst [vmem:[%s90] sm:$0xff] %v131
    %v133 = vld [vmem:[%s109] sm:$0xff]
    %v134 = vmul.f32 %v133, 7.8125e-13
    %135 = vst [vmem:[%s109] sm:$0xff] %v134
    %v136 = vld [vmem:[%s116] sm:$0xff]
    %v137 = vmul.f32 %v136, 1.953125e-10
    %138 = vst [vmem:[%s116] sm:$0xff] %v137
  $region33: #{_fused_nerf_losses.1} parent=0 // pred_fallthru
    _
  // Predicated region
  $region34: #{_fused_nerf_losses.1} parent=0 // pred_check
    _
  $region35: #{_fused_nerf_losses.1} parent=0 // pred_check_branch
    %140 = sbr.rel (0) target = $region37
  $region36: #{_fused_nerf_losses.1} parent=0 // pred_region
    _
  $region37: #{_fused_nerf_losses.1} parent=0 // pred_fallthru
    _
  // Predicated region
  $region38: #{_fused_nerf_losses.1} parent=0 // pred_check
    _
  $region39: #{_fused_nerf_losses.1} parent=0 // pred_check_branch
    %142 = sbr.rel (0) target = $region41
  $region40: #{_fused_nerf_losses.1} parent=0 // pred_region
    _
  $region41: #{_fused_nerf_losses.1} parent=0 // pred_fallthru
    _

</llo_original>
